<compile_context>
chip_gen: v7x
topology: tpu7x:2x2x1
jax: 0.10.0
libtpu: 0.0.40
codegen_flags: <defaults>
</compile_context>

<pallas_src>
import functools
import math

import jax
import jax.numpy as jnp
from jax import lax
from jax.experimental import pallas as pl
from jax.experimental.pallas import tpu as pltpu


# ---------------------------------------------------------------------------
# Config (mirrors the fields GeneMoEGate reads from `config`)
# ---------------------------------------------------------------------------
class Cfg:
    num_experts_per_tok = 2
    n_routed_experts = 8
    scoring_func = "softmax"
    aux_loss_alpha = 0.01
    seq_aux = True
    GE_temprature = 2.0
    norm_topk_prob = True
    hidden_size = 32
    gene_size = 16


def _round_up(x, m):
    return ((x + m - 1) // m) * m


def _choose_tile(S, B, H, itemsize, tile_seq):
    """Pick the token tile TM (multiple of 128) from a per-step byte budget."""
    if tile_seq is not None:
        tm = max(128, _round_up(tile_seq, 128))
    else:
        budget = 1 << 20                       # ~1 MiB of x-bytes per grid step
        tm = max(128, (budget // max(1, H * itemsize)) // 128 * 128)
        tm = min(tm, 16384)
    tm = min(tm, _round_up(S, 128))
    # With B == 1, make sure the grid has >= 2 steps on a parallel axis so both
    # TensorCores (v7x) get work.
    if B == 1 and S > 256:
        while _round_up(S, tm) // tm < 2 and tm > 128:
            tm = max(128, _round_up((tm + 1) // 2, 128))
    return tm


# ---------------------------------------------------------------------------
# Pallas kernel: fused matmul -> bias -> softmax -> iterative top-k
# (lane-dense: tokens live on the 128-lane axis, experts on sublanes)
# ---------------------------------------------------------------------------
def _gate_kernel(x_ref, b_ref, w_ref, scores_ref, packed_ref,
                 *, top_k, norm_topk, n_experts):
    # x_ref:      (TM, H)    token activations (compute dtype)
    # b_ref:      (B, E, 1)  gene bias table (resident; temperature already folded)
    # w_ref:      (E, H)     token gate weight, pre-scaled by 1/(1 + 1/temp)
    # scores_ref: (E, TM)    f32 softmax scores
    # packed_ref: (2K, TM)   f32: rows [0,K) = top-k ids (as f32), [K,2K) = weights
    bias = b_ref[pl.program_id(0)]                                 # (E, 1)

    # (E, H) x (TM, H) contracting on H -> (E, TM): tokens on lanes.
    logits = lax.dot_general(
        w_ref[...], x_ref[...],
        dimension_numbers=(((1,), (1,)), ((), ())),
        preferred_element_type=jnp.float32)                        # (E, TM)
    logits = logits + bias                                         # broadcast over lanes

    # softmax over the E sublane rows
    m = jnp.max(logits, axis=0, keepdims=True)                     # (1, TM)
    e = jnp.exp(logits - m)
    s = jnp.sum(e, axis=0, keepdims=True)                          # (1, TM)
    scores = e * pl.reciprocal(s, approx=True)                     # EUP slot (free-ish)
    scores_ref[...] = scores

    # iterative top-k over the expert (sublane) axis; lowest index wins ties
    iota = lax.broadcasted_iota(jnp.int32, scores.shape, 0)
    work = scores
    idx_rows, val_rows = [], []
    for _ in range(top_k):
        mx = jnp.max(work, axis=0, keepdims=True)                  # (1, TM)
        sel = jnp.min(jnp.where(work == mx, iota, n_experts),
                      axis=0, keepdims=True)                       # (1, TM) int32
        idx_rows.append(sel.astype(jnp.float32))
        val_rows.append(mx)
        work = jnp.where(iota == sel, -jnp.inf, work)

    if top_k > 1 and norm_topk:
        total = val_rows[0]
        for t in range(1, top_k):
            total = total + val_rows[t]
        inv = 1.0 / (total + 1e-20)                                # exact; 1-2 ops/tile
        val_rows = [v * inv for v in val_rows]

    # single lane-dense full-block store for idx + weights
    packed_ref[...] = jnp.concatenate(idx_rows + val_rows, axis=0)  # (2K, TM)


# ---------------------------------------------------------------------------
# Wrapper
# ---------------------------------------------------------------------------
def gene_moe_gate(hidden_states, gene_vectors, weight_token, weight_gene, cfg,
                  tile_seq=None, return_scores=False):
    """hidden_states: (B, S, H); gene_vectors: (B, G);
    weight_token: (E, H); weight_gene: (E, G)   (PyTorch layouts).

    Returns (topk_idx (N,K) int32, topk_weight (N,K) f32, aux_loss) matching the
    PyTorch module; with return_scores=True also returns the softmax scores in
    the lane-dense (B, E, S) layout (no transpose of the largest tensor)."""
    assert cfg.scoring_func == "softmax"
    B, S, H = hidden_states.shape
    _, G = gene_vectors.shape
    E = cfg.n_routed_experts
    K = cfg.num_experts_per_tok

    inv_temp = 1.0 / float(cfg.GE_temprature)
    denom = 1.0 + inv_temp

    # Fold 1/denom into the token gate weight; keep activation dtype so bf16
    # inputs run a native bf16 MXU matmul (f32 accumulation in-kernel).
    compute_dtype = hidden_states.dtype
    w_scaled = (weight_token.astype(jnp.float32) / denom).astype(compute_dtype)   # (E, H)

    # Hoisted gene path: one (B,G)x(G,E) matmul, temperature factors folded in.
    gene_bias = (gene_vectors.astype(jnp.float32)
                 @ weight_gene.astype(jnp.float32).T) * (inv_temp / denom)         # (B, E)
    gene_bias = gene_bias[:, :, None]                                              # (B, E, 1)

    itemsize = jnp.dtype(compute_dtype).itemsize
    TM = _choose_tile(S, B, H, itemsize, tile_seq)
    S_pad = _round_up(S, TM)

    x = hidden_states
    if S_pad != S:                    # pad instead of requiring S % TM == 0
        x = jnp.pad(x, ((0, 0), (0, S_pad - S), (0, 0)))

    grid = (B, S_pad // TM)
    kernel = functools.partial(_gate_kernel, top_k=K,
                               norm_topk=bool(cfg.norm_topk_prob), n_experts=E)

    scores_t, packed = pl.pallas_call(
        kernel,
        out_shape=(
            jax.ShapeDtypeStruct((B, E, S_pad), jnp.float32),
            jax.ShapeDtypeStruct((B, 2 * K, S_pad), jnp.float32),
        ),
        grid_spec=pltpu.PrefetchScalarGridSpec(
            num_scalar_prefetch=0,
            grid=grid,
            in_specs=[
                pl.BlockSpec((None, TM, H), lambda b, s: (b, s, 0)),   # x tile
                pl.BlockSpec((B, E, 1), lambda b, s: (0, 0, 0)),       # gene bias (resident)
                pl.BlockSpec((E, H), lambda b, s: (0, 0)),             # gate weight (resident)
            ],
            out_specs=[
                pl.BlockSpec((None, E, TM), lambda b, s: (b, 0, s)),       # scores (E, TM)
                pl.BlockSpec((None, 2 * K, TM), lambda b, s: (b, 0, s)),   # packed idx+val
            ],
        ),
        compiler_params=pltpu.CompilerParams(
            dimension_semantics=("parallel", "parallel")),
    )(x, gene_bias, w_scaled)

    # Drop sequence padding (no-op when S_pad == S) and unpack idx/val.
    scores_t = scores_t[:, :, :S]                          # (B, E, S) f32
    topk_idx_t = packed[:, :K, :S].astype(jnp.int32)       # (B, K, S)
    topk_val_t = packed[:, K:, :S]                         # (B, K, S) f32

    # ---- aux loss (plain JAX glue, fully vectorized: one_hot + sum) ----
    aux_loss = None
    if cfg.aux_loss_alpha > 0.0:
        idx_for_aux = topk_idx_t.reshape(B, K * S)
        onehot = jax.nn.one_hot(idx_for_aux, E, dtype=jnp.float32)   # (B, K*S, E)
        if cfg.seq_aux:
            ce = onehot.sum(axis=1) / (S * K / E)                    # (B, E)
            aux_loss = jnp.mean(jnp.sum(ce * scores_t.mean(axis=2), axis=1)) \
                * cfg.aux_loss_alpha
        else:
            ce = onehot.reshape(-1, E).mean(axis=0)                  # (E,)
            Pi = scores_t.mean(axis=(0, 2))                          # (E,)
            aux_loss = jnp.sum(Pi * ce * E) * cfg.aux_loss_alpha

    # PyTorch-layout top-k outputs (tiny tensors; cheap transpose).
    N = B * S
    topk_idx = jnp.transpose(topk_idx_t, (0, 2, 1)).reshape(N, K)
    topk_weight = jnp.transpose(topk_val_t, (0, 2, 1)).reshape(N, K)

    if return_scores:
        return topk_idx, topk_weight, aux_loss, scores_t
    return topk_idx, topk_weight, aux_loss


# ---------------------------------------------------------------------------
# Deterministic parameter init (kaiming_uniform_ with a=sqrt(5))
# ---------------------------------------------------------------------------
def _kaiming_uniform(key, shape):
    fan_in = shape[1]
    bound = 1.0 / math.sqrt(fan_in)
    return jax.random.uniform(key, shape, jnp.float32, minval=-bound, maxval=bound)


if __name__ == "__main__":
    cfg = Cfg()
    B, S = 2, 8
    H, G, E, K = cfg.hidden_size, cfg.gene_size, cfg.n_routed_experts, cfg.num_experts_per_tok

    key = jax.random.PRNGKey(0)
    k_h, k_g, k_wt, k_wg = jax.random.split(key, 4)

    hidden_states = jax.random.normal(k_h, (B, S, H), jnp.float32)
    gene_vectors = jax.random.normal(k_g, (B, G), jnp.float32)
    weight_token = _kaiming_uniform(k_wt, (E, H))
    weight_gene = _kaiming_uniform(k_wg, (E, G))

    topk_idx, topk_weight, aux_loss, scores_t = gene_moe_gate(
        hidden_states, gene_vectors, weight_token, weight_gene, cfg,
        return_scores=True)
    jax.block_until_ready((topk_idx, topk_weight, aux_loss, scores_t))

    # ---- pure-JAX reference check (original formula) ----
    x = hidden_states.reshape(-1, H)
    g = jnp.broadcast_to(gene_vectors[:, None, :], (B, S, G)).reshape(-1, G)
    logits_ref = (x @ weight_token.T + (g @ weight_gene.T) / cfg.GE_temprature) \
        / (1.0 + 1.0 / cfg.GE_temprature)
    scores_ref = jax.nn.softmax(logits_ref, axis=-1)
    tv_ref, ti_ref = jax.lax.top_k(scores_ref, K)
    tv_ref = tv_ref / (tv_ref.sum(axis=-1, keepdims=True) + 1e-20)

    onehot_ref = jax.nn.one_hot(ti_ref.reshape(B, S * K), E, dtype=jnp.float32)
    ce_ref = onehot_ref.sum(axis=1) / (S * K / E)
    aux_ref = jnp.mean(
        jnp.sum(ce_ref * scores_ref.reshape(B, S, E).mean(axis=1), axis=1)) \
        * cfg.aux_loss_alpha

    scores_pt = jnp.transpose(scores_t, (0, 2, 1)).reshape(B * S, E)

    # Tolerances account for the EUP approximate reciprocal in the softmax
    # (same per-token factor for every expert, so ranking and the normalized
    # top-k weights are unaffected).
    assert jnp.all(topk_idx == ti_ref), "topk indices mismatch"
    assert jnp.allclose(scores_pt, scores_ref, atol=2e-3), "scores mismatch"
    assert jnp.allclose(topk_weight, tv_ref, atol=2e-3), "topk weights mismatch"
    assert aux_loss is not None and jnp.isfinite(aux_loss)
    assert jnp.allclose(aux_loss, aux_ref, atol=1e-4), "aux loss mismatch"

    print("KERNEL_OK")
</pallas_src>

<mosaic_0001>
module attributes {stable_mosaic.version = 11 : i64} {
  func.func @_gate_kernel(%arg0: i32, %arg1: i32, %arg2: memref<1x128x32xf32, #tpu.memory_space<vmem>>, %arg3: memref<2x8x1xf32, #tpu.memory_space<vmem>>, %arg4: memref<8x32xf32, #tpu.memory_space<vmem>>, %arg5: memref<1x8x128xf32, #tpu.memory_space<vmem>>, %arg6: memref<1x4x128xf32, #tpu.memory_space<vmem>>) attributes {dimension_semantics = [#tpu.dimension_semantics<parallel>, #tpu.dimension_semantics<parallel>], iteration_bounds = array<i64: 2, 1>, scalar_prefetch = 0 : i64, scratch_operands = 0 : i64, tpu.core_type = #tpu.core_type<tc>, window_params = [{transform_indices = @transform_0, window_bounds = array<i64: 1, 128, 32>}, {pipeline_mode = #tpu.pipeline_mode<synchronous>, transform_indices = @transform_1, window_bounds = array<i64: 2, 8, 1>}, {pipeline_mode = #tpu.pipeline_mode<synchronous>, transform_indices = @transform_2, window_bounds = array<i64: 8, 32>}, {transform_indices = @transform_3, window_bounds = array<i64: 1, 8, 128>}, {transform_indices = @transform_4, window_bounds = array<i64: 1, 4, 128>}]} {
    %0 = arith.index_cast %arg0 : i32 to index
    %c0 = arith.constant 0 : index
    %c0_0 = arith.constant 0 : index
    %1 = vector.load %arg3[%0, %c0, %c0_0] : memref<2x8x1xf32, #tpu.memory_space<vmem>>, vector<1x8x1xf32>
    %2 = vector.shape_cast %1 : vector<1x8x1xf32> to vector<8x1xf32>
    %c0_1 = arith.constant 0 : index
    %c0_2 = arith.constant 0 : index
    %3 = vector.load %arg4[%c0_1, %c0_2] : memref<8x32xf32, #tpu.memory_space<vmem>>, vector<8x32xf32>
    %c0_3 = arith.constant 0 : index
    %c0_4 = arith.constant 0 : index
    %c0_5 = arith.constant 0 : index
    %4 = vector.load %arg2[%c0_3, %c0_4, %c0_5] : memref<1x128x32xf32, #tpu.memory_space<vmem>>, vector<1x128x32xf32>
    %5 = vector.shape_cast %4 : vector<1x128x32xf32> to vector<128x32xf32>
    %cst = arith.constant dense<0.000000e+00> : vector<8x128xf32>
    %6 = tpu.matmul %3, %5, %cst {dimension_numbers = #tpu.dot_dimension_numbers<[1], [1], [0], [0], [0, 0, 1, 0], [], []>} : vector<8x32xf32>, vector<128x32xf32>, vector<8x128xf32> -> vector<8x128xf32>
    %7 = vector.broadcast %2 : vector<8x1xf32> to vector<8x128xf32>
    %8 = arith.addf %6, %7 : vector<8x128xf32>
    %cst_6 = arith.constant dense<0xFF800000> : vector<128xf32>
    %9 = vector.multi_reduction <maximumf>, %8, %cst_6 [0] : vector<8x128xf32> to vector<128xf32>
    %10 = vector.shape_cast %9 : vector<128xf32> to vector<1x128xf32>
    %11 = vector.broadcast %10 : vector<1x128xf32> to vector<8x128xf32>
    %12 = arith.subf %8, %11 : vector<8x128xf32>
    %13 = math.exp %12 : vector<8x128xf32>
    %cst_7 = arith.constant dense<0.000000e+00> : vector<128xf32>
    %14 = vector.multi_reduction <add>, %13, %cst_7 [0] : vector<8x128xf32> to vector<128xf32>
    %15 = vector.shape_cast %14 : vector<128xf32> to vector<1x128xf32>
    %16 = tpu.reciprocal %15 {approx = true} : vector<1x128xf32> -> vector<1x128xf32>
    %17 = vector.broadcast %16 : vector<1x128xf32> to vector<8x128xf32>
    %18 = arith.mulf %13, %17 : vector<8x128xf32>
    %c0_8 = arith.constant 0 : index
    %c0_9 = arith.constant 0 : index
    %c0_10 = arith.constant 0 : index
    %19 = vector.load %arg5[%c0_8, %c0_9, %c0_10] : memref<1x8x128xf32, #tpu.memory_space<vmem>>, vector<1x8x128xf32>
    %20 = vector.shape_cast %19 : vector<1x8x128xf32> to vector<8x128xf32>
    %21 = vector.shape_cast %18 : vector<8x128xf32> to vector<1x8x128xf32>
    tpu.vector_store %arg5[%c0_8, %c0_9, %c0_10], %21 {strides = array<i32>} : memref<1x8x128xf32, #tpu.memory_space<vmem>>, vector<1x8x128xf32>,
    %22 = tpu.iota {dimensions = array<i32: 0>} : vector<8x128xi32>
    %cst_11 = arith.constant dense<0xFF800000> : vector<128xf32>
    %23 = vector.multi_reduction <maximumf>, %18, %cst_11 [0] : vector<8x128xf32> to vector<128xf32>
    %24 = vector.shape_cast %23 : vector<128xf32> to vector<1x128xf32>
    %25 = vector.broadcast %24 : vector<1x128xf32> to vector<8x128xf32>
    %26 = arith.cmpf oeq, %18, %25 : vector<8x128xf32>
    %c8_i32 = arith.constant 8 : i32
    %27 = vector.broadcast %c8_i32 : i32 to vector<8x128xi32>
    %28 = arith.select %26, %22, %27 : vector<8x128xi1>, vector<8x128xi32>
    %cst_12 = arith.constant dense<2147483647> : vector<128xi32>
    %29 = vector.multi_reduction <minsi>, %28, %cst_12 [0] : vector<8x128xi32> to vector<128xi32>
    %30 = vector.shape_cast %29 : vector<128xi32> to vector<1x128xi32>
    %31 = arith.sitofp %30 : vector<1x128xi32> to vector<1x128xf32>
    %32 = vector.broadcast %30 : vector<1x128xi32> to vector<8x128xi32>
    %33 = arith.cmpi eq, %22, %32 : vector<8x128xi32>
    %cst_13 = arith.constant 0xFF800000 : f32
    %34 = vector.broadcast %cst_13 : f32 to vector<8x128xf32>
    %35 = arith.select %33, %34, %18 : vector<8x128xi1>, vector<8x128xf32>
    %cst_14 = arith.constant dense<0xFF800000> : vector<128xf32>
    %36 = vector.multi_reduction <maximumf>, %35, %cst_14 [0] : vector<8x128xf32> to vector<128xf32>
    %37 = vector.shape_cast %36 : vector<128xf32> to vector<1x128xf32>
    %38 = vector.broadcast %37 : vector<1x128xf32> to vector<8x128xf32>
    %39 = arith.cmpf oeq, %35, %38 : vector<8x128xf32>
    %c8_i32_15 = arith.constant 8 : i32
    %40 = vector.broadcast %c8_i32_15 : i32 to vector<8x128xi32>
    %41 = arith.select %39, %22, %40 : vector<8x128xi1>, vector<8x128xi32>
    %cst_16 = arith.constant dense<2147483647> : vector<128xi32>
    %42 = vector.multi_reduction <minsi>, %41, %cst_16 [0] : vector<8x128xi32> to vector<128xi32>
    %43 = vector.shape_cast %42 : vector<128xi32> to vector<1x128xi32>
    %44 = arith.sitofp %43 : vector<1x128xi32> to vector<1x128xf32>
    %45 = arith.addf %24, %37 : vector<1x128xf32>
    %cst_17 = arith.constant 9.99999968E-21 : f32
    %46 = vector.broadcast %cst_17 : f32 to vector<1x128xf32>
    %47 = arith.addf %45, %46 : vector<1x128xf32>
    %cst_18 = arith.constant 1.000000e+00 : f32
    %48 = vector.broadcast %cst_18 : f32 to vector<1x128xf32>
    %49 = arith.divf %48, %47 : vector<1x128xf32>
    %50 = arith.mulf %24, %49 : vector<1x128xf32>
    %51 = arith.mulf %37, %49 : vector<1x128xf32>
    %52 = tpu.concatenate %31, %44, %50, %51 in 0 : vector<1x128xf32>, vector<1x128xf32>, vector<1x128xf32>, vector<1x128xf32> -> vector<4x128xf32>
    %c0_19 = arith.constant 0 : index
    %c0_20 = arith.constant 0 : index
    %c0_21 = arith.constant 0 : index
    %53 = vector.load %arg6[%c0_19, %c0_20, %c0_21] : memref<1x4x128xf32, #tpu.memory_space<vmem>>, vector<1x4x128xf32>
    %54 = vector.shape_cast %53 : vector<1x4x128xf32> to vector<4x128xf32>
    %55 = vector.shape_cast %52 : vector<4x128xf32> to vector<1x4x128xf32>
    tpu.vector_store %arg6[%c0_19, %c0_20, %c0_21], %55 {strides = array<i32>} : memref<1x4x128xf32, #tpu.memory_space<vmem>>, vector<1x4x128xf32>,
    return
  }
  func.func @transform_0(%arg0: i32, %arg1: i32) -> (i32, i32, i32) {
    %c0_i32 = arith.constant 0 : i32
    %c0_i32_0 = arith.constant 0 : i32
    return %arg0, %arg1, %c0_i32 : i32, i32, i32
  }
  func.func @transform_1(%arg0: i32, %arg1: i32) -> (i32, i32, i32) {
    %c0_i32 = arith.constant 0 : i32
    %c0_i32_0 = arith.constant 0 : i32
    %c0_i32_1 = arith.constant 0 : i32
    %c0_i32_2 = arith.constant 0 : i32
    return %c0_i32, %c0_i32_0, %c0_i32_1 : i32, i32, i32
  }
  func.func @transform_2(%arg0: i32, %arg1: i32) -> (i32, i32) {
    %c0_i32 = arith.constant 0 : i32
    %c0_i32_0 = arith.constant 0 : i32
    %c0_i32_1 = arith.constant 0 : i32
    return %c0_i32, %c0_i32_0 : i32, i32
  }
  func.func @transform_3(%arg0: i32, %arg1: i32) -> (i32, i32, i32) {
    %c0_i32 = arith.constant 0 : i32
    %c0_i32_0 = arith.constant 0 : i32
    return %arg0, %c0_i32, %arg1 : i32, i32, i32
  }
  func.func @transform_4(%arg0: i32, %arg1: i32) -> (i32, i32, i32) {
    %c0_i32 = arith.constant 0 : i32
    %c0_i32_0 = arith.constant 0 : i32
    return %arg0, %c0_i32, %arg1 : i32, i32, i32
  }
}

</mosaic_0001>

<llo_original>
// kernel: tpu_custom_call.1
$region0: #{tpu_custom_call.1}
  #allocation0 [shape = 'u32[]', space=smem, size = 0x4, offset = 0x4, fixed_abs, tag = 'smem constant byte address 0x4 - core index']
  #allocation1 [shape = 'u32[144,128]{1,0:T(1,128)}', space=vmem, size = 0x12000, scoped, tag = 'internal scratch']
  %s0 = inlined_call_operand.vmem [shape: f32[2,128,32], index: 0, kind: input, shape index: {}]
  %s1 = inlined_call_operand.vmem [shape: f32[2,8,1], index: 1, kind: input, shape index: {}]
  %s2 = inlined_call_operand.vmem [shape: f32[8,32], index: 2, kind: input, shape index: {}]
  %s3 = inlined_call_operand.hbm [shape: f32[2,8,128], index: 3, kind: output, shape index: {0}]
  %s4 = inlined_call_operand.hbm [shape: f32[2,4,128], index: 4, kind: output, shape index: {1}]
  %5 = xla_tuple %s3, %s4
  %s6 = sld [smem:[#allocation0]]
  $region53: #{tpu_custom_call.1} parent=0
    _
  %s8 = ssub.s32 1, %s6
  %s9 = scalar_select 0, %s8, %s6
  $region1: #{tpu_custom_call.1} parent=0
    #allocation2 [shape = 'u8[8192]{0}', space=vmem, size = 0x2000, scoped, tag = 'output window, operand 0']
    #allocation3 [shape = 's32[2]{0}', space=sflag, size = 0x8, scoped, tag = 'scoped memory for tpu_custom_call.1']
    #allocation4 [shape = 'u8[4096]{0}', space=vmem, size = 0x1000, scoped, tag = 'output window, operand 1']
    #allocation5 [shape = 's32[2]{0}', space=sflag, size = 0x8, scoped, tag = 'scoped memory for tpu_custom_call.1']
    %10 = vsyncpa [#allocation3], 0
    %s11 = scalar_lea.sflag [#allocation3], 1
    %12 = vsyncpa %s11, 0
    %13 = vsyncpa [#allocation5], 0
    %s14 = scalar_lea.sflag [#allocation5], 1
    %15 = vsyncpa %s14, 0
    loop: start=0, step=1, limit=4
    $region2: #{tpu_custom_call.1} parent=1 // loop_pre_header
      _
    $region3: #{tpu_custom_call.1} parent=1 // loop_header
      %s17 = sphi 0, %s21
      %p18 = scmp.ge.s32.totalorder %s17, 4
      %s24 = sphi 0, %s36
      %s25 = sphi 0, %s32
      %s26 = sphi 0, %s24
      %s27 = sphi 0, %s25
      %s28 = sphi 0, %s26
      %s29 = sphi 0, %s27
      %s41 = sphi 0, %s43
      %s44 = sphi 0, %s41
      %s45 = sphi 0, %s44
      %s61 = sphi 0, %s45
      %s65 = sphi 0, %s65
      %s67 = sphi 0, %s65
      %s68 = sphi 0, %s67
      %s82 = sphi 0, %s68
      %s86 = sphi 0, %s86
      %s88 = sphi 0, %s86
      %s89 = sphi 0, %s88
      %s103 = sphi 0, %s89
      %s111 = sphi 0, %s113
      %s114 = sphi 0, %s111
      %s115 = sphi 0, %s114
      %s131 = sphi 0, %s115
      %s139 = sphi 0, %s141
      %s142 = sphi 0, %s139
      %s143 = sphi 0, %s142
      %s159 = sphi 0, %s143
    $region4: #{tpu_custom_call.1} parent=1 // loop_header_branch
      %20 = sbr.rel (%p18) target = $region8
    $region5: #{tpu_custom_call.1} parent=1 // loop_body
      %s22 = ssub.s32 %s17, 1
      %s23 = ssub.s32 %s17, 2
      %s30 = sadd.s32 1, %s25
      %p31 = scmp.ge.s32.totalorder %s30, 1
      %s32 = scalar_select %p31, 0, %s30
      %s33 = sadd.s32 1, %s24
      %s34 = scalar_select %p31, %s33, %s24
      %p35 = scmp.ge.s32.totalorder %s34, 2
      %s36 = scalar_select %p35, 0, %s34
      %s37 = ssub.s32 %s24, %s36
      %s38 = ssub.s32 %s25, %s32
      %s39 = sor.u32 %s37, %s38
      %p40 = scmp.eq.s32.totalorder %s39, 0
      %s42 = sadd.s32 %s41, 1
      %s43 = scalar_select %p40, %s41, %s42
      %p46 = pneg %p40
      %p47 = scmp.eq.s32.totalorder %s17, 1
      %p48 = por %p46, %p47
      %p49 = scmp.ne.s32.totalorder %s41, %s44
      %p50 = scmp.eq.s32.totalorder %s17, 0
      %p51 = por %p49, %p50
      %p52 = scmp.ne.s32.totalorder %s41, %s44
      %p53 = scmp.eq.s32.totalorder %s22, 1
      %p54 = por %p52, %p53
      %p55 = scmp.ne.s32.totalorder %s44, %s45
      %p56 = scmp.eq.s32.totalorder %s22, 0
      %p57 = por %p55, %p56
      %p58 = scmp.ne.s32.totalorder %s44, %s45
      %p59 = scmp.eq.s32.totalorder %s23, 1
      %p60 = por %p58, %p59
      %p62 = scmp.ne.s32.totalorder %s45, %s61
      %p63 = scmp.eq.s32.totalorder %s23, 0
      %p64 = por %p62, %p63
      %s66 = sadd.s32 %s65, 1
      %p69 = scmp.eq.s32.totalorder %s17, 1
      %p70 = scmp.ne.s32.totalorder %s65, %s67
      %p71 = scmp.eq.s32.totalorder %s17, 0
      %p72 = por %p70, %p71
      %p73 = scmp.ne.s32.totalorder %s65, %s67
      %p74 = scmp.eq.s32.totalorder %s22, 1
      %p75 = por %p73, %p74
      %p76 = scmp.ne.s32.totalorder %s67, %s68
      %p77 = scmp.eq.s32.totalorder %s22, 0
      %p78 = por %p76, %p77
      %p79 = scmp.ne.s32.totalorder %s67, %s68
      %p80 = scmp.eq.s32.totalorder %s23, 1
      %p81 = por %p79, %p80
      %p83 = scmp.ne.s32.totalorder %s68, %s82
      %p84 = scmp.eq.s32.totalorder %s23, 0
      %p85 = por %p83, %p84
      %s87 = sadd.s32 %s86, 1
      %p90 = scmp.eq.s32.totalorder %s17, 1
      %p91 = scmp.ne.s32.totalorder %s86, %s88
      %p92 = scmp.eq.s32.totalorder %s17, 0
      %p93 = por %p91, %p92
      %p94 = scmp.ne.s32.totalorder %s86, %s88
      %p95 = scmp.eq.s32.totalorder %s22, 1
      %p96 = por %p94, %p95
      %p97 = scmp.ne.s32.totalorder %s88, %s89
      %p98 = scmp.eq.s32.totalorder %s22, 0
      %p99 = por %p97, %p98
      %p100 = scmp.ne.s32.totalorder %s88, %s89
      %p101 = scmp.eq.s32.totalorder %s23, 1
      %p102 = por %p100, %p101
      %p104 = scmp.ne.s32.totalorder %s89, %s103
      %p105 = scmp.eq.s32.totalorder %s23, 0
      %p106 = por %p104, %p105
      %s107 = ssub.s32 %s24, %s36
      %s108 = ssub.s32 %s25, %s32
      %s109 = sor.u32 %s107, %s108
      %p110 = scmp.eq.s32.totalorder %s109, 0
      %s112 = sadd.s32 %s111, 1
      %s113 = scalar_select %p110, %s111, %s112
      %p116 = pneg %p110
      %p117 = scmp.eq.s32.totalorder %s17, 1
      %p118 = por %p116, %p117
      %p119 = scmp.ne.s32.totalorder %s111, %s114
      %p120 = scmp.eq.s32.totalorder %s17, 0
      %p121 = por %p119, %p120
      %p122 = scmp.ne.s32.totalorder %s111, %s114
      %p123 = scmp.eq.s32.totalorder %s22, 1
      %p124 = por %p122, %p123
      %p125 = scmp.ne.s32.totalorder %s114, %s115
      %p126 = scmp.eq.s32.totalorder %s22, 0
      %p127 = por %p125, %p126
      %p128 = scmp.ne.s32.totalorder %s114, %s115
      %p129 = scmp.eq.s32.totalorder %s23, 1
      %p130 = por %p128, %p129
      %p132 = scmp.ne.s32.totalorder %s115, %s131
      %p133 = scmp.eq.s32.totalorder %s23, 0
      %p134 = por %p132, %p133
      %s135 = ssub.s32 %s24, %s36
      %s136 = ssub.s32 %s25, %s32
      %s137 = sor.u32 %s135, %s136
      %p138 = scmp.eq.s32.totalorder %s137, 0
      %s140 = sadd.s32 %s139, 1
      %s141 = scalar_select %p138, %s139, %s140
      %p144 = pneg %p138
      %p145 = scmp.eq.s32.totalorder %s17, 1
      %p146 = por %p144, %p145
      %p147 = scmp.ne.s32.totalorder %s139, %s142
      %p148 = scmp.eq.s32.totalorder %s17, 0
      %p149 = por %p147, %p148
      %p150 = scmp.ne.s32.totalorder %s139, %s142
      %p151 = scmp.eq.s32.totalorder %s22, 1
      %p152 = por %p150, %p151
      %p153 = scmp.ne.s32.totalorder %s142, %s143
      %p154 = scmp.eq.s32.totalorder %s22, 0
      %p155 = por %p153, %p154
      %p156 = scmp.ne.s32.totalorder %s142, %s143
      %p157 = scmp.eq.s32.totalorder %s23, 1
      %p158 = por %p156, %p157
      %p160 = scmp.ne.s32.totalorder %s143, %s159
      %p161 = scmp.eq.s32.totalorder %s23, 0
      %p162 = por %p160, %p161
      %p163 = scmp.le.s32.totalorder 1, %s17
      %p164 = scmp.lt.s32.totalorder %s17, 3
      %p165 = pnand %p163, %p164
      %p166 = pneg %p165
      // Predicated region
      $region9: #{tpu_custom_call.1} parent=5 // pred_check
        _
      $region10: #{tpu_custom_call.1} parent=5 // pred_check_branch
        %168 = sbr.rel (%p165) target = $region12
      $region11: #{tpu_custom_call.1} parent=5 // pred_region
        %s169 = ssub.s32 %s17, 1
        // Predicated region
        $region13: #{tpu_custom_call.1} parent=11 // pred_check
          %p170 = pneg %p78
        $region14: #{tpu_custom_call.1} parent=11 // pred_check_branch
          %172 = sbr.rel (%p170) target = $region16
        $region15: #{tpu_custom_call.1} parent=11 // pred_region
          _
        $region16: #{tpu_custom_call.1} parent=11 // pred_fallthru
          _
        // Predicated region
        $region17: #{tpu_custom_call.1} parent=11 // pred_check
          %p173 = pneg %p99
        $region18: #{tpu_custom_call.1} parent=11 // pred_check_branch
          %175 = sbr.rel (%p173) target = $region20
        $region19: #{tpu_custom_call.1} parent=11 // pred_region
          _
        $region20: #{tpu_custom_call.1} parent=11 // pred_fallthru
          _
      $region12: #{tpu_custom_call.1} parent=5 // pred_fallthru
        _
      %p176 = scmp.lt.s32.totalorder %s17, 2
      // Predicated region
      $region21: #{tpu_custom_call.1} parent=5 // pred_check
        %p177 = pneg %p176
      $region22: #{tpu_custom_call.1} parent=5 // pred_check_branch
        %179 = sbr.rel (%p177) target = $region24
      $region23: #{tpu_custom_call.1} parent=5 // pred_region
        // Predicated region
        $region25: #{tpu_custom_call.1} parent=23 // pred_check
          %p180 = pneg %p51
        $region26: #{tpu_custom_call.1} parent=23 // pred_check_branch
          %182 = sbr.rel (%p180) target = $region28
        $region27: #{tpu_custom_call.1} parent=23 // pred_region
          %s183 = smul.u32 16, %s25
          %p184 = scmp.lt.s32.totalorder %s24, 1
          %s185 = scalar_select %p184, %s24, 1
          %p186 = scmp.lt.s32.totalorder %s183, 15
          %s187 = scalar_select %p186, %s183, 15
          %s188 = smul.addr %s185, 16
          %s189 = sadd.s32 %s187, %s188
          %s190 = smul.addr %s189, 8
          %s191 = scalar_lea.vmem %s0, %s190
          %s192 = smul.u32 16, %s25
        $region28: #{tpu_custom_call.1} parent=23 // pred_fallthru
          _
      $region24: #{tpu_custom_call.1} parent=5 // pred_fallthru
        _
      %p193 = scmp.le.s32.totalorder 1, %s17
      %p194 = scmp.lt.s32.totalorder %s17, 3
      %p195 = pnand %p193, %p194
      %p196 = pneg %p195
      // Predicated region
      $region29: #{tpu_custom_call.1} parent=5 // pred_check
        _
      $region30: #{tpu_custom_call.1} parent=5 // pred_check_branch
        %198 = sbr.rel (%p195) target = $region32
      $region31: #{tpu_custom_call.1} parent=5 // pred_region
        %s199 = ssub.s32 %s17, 1
        %s200 = smul.u32 16, %s27
        %p201 = scmp.lt.s32.totalorder %s26, 1
        %s202 = scalar_select %p201, %s26, 1
        %p203 = scmp.lt.s32.totalorder %s200, 15
        %s204 = scalar_select %p203, %s200, 15
        %s205 = smul.addr %s202, 16
        %s206 = sadd.s32 %s204, %s205
        %s207 = smul.addr %s206, 8
        %s208 = scalar_lea.vmem %s0, %s207
        %p209 = pneg %p57
        %p210 = pneg %p54
        %p211 = pneg %p78
        %p212 = pneg %p75
        %p213 = pneg %p99
        %p214 = pneg %p96
        %p215 = pneg %p127
        %p216 = pneg %p124
        %s217 = sand.u32 %s114, 1
        %s218 = scalar_lea.sflag [#allocation3], %s217
        %s219 = sand.u32 %s114, 1
        %s220 = smul.addr %s219, 8
        %s221 = scalar_lea.vmem [#allocation2], %s220
        %p222 = pneg %p155
        %p223 = pneg %p152
        %s224 = sand.u32 %s142, 1
        %s225 = scalar_lea.sflag [#allocation5], %s224
        %s226 = sand.u32 %s142, 1
        %s227 = smul.addr %s226, 4
        %s228 = scalar_lea.vmem [#allocation4], %s227
        %s229 = smul.u32 16, %s27
        %p230 = scmp.lt.s32.totalorder %s26, 1
        %s231 = scalar_select %p230, %s26, 1
        %p232 = scmp.lt.s32.totalorder %s229, 15
        %s233 = scalar_select %p232, %s229, 15
        %s234 = smul.addr %s231, 16
        %s235 = sadd.s32 %s233, %s234
        %s236 = smul.addr %s235, 8
        %s237 = scalar_lea.vmem %s0, %s236
        %s238 = smul.u32 16, %s27
        %s239 = smul.u32 %s26, 8
        %s240 = scalar_lea.vmem %s1, %s239
        %v241 = vld [vmem:[%s240] sm:$0xff]
        %v242 = vld [vmem:[%s2] sm:$0xff]
        %v243 = vld [vmem:[%s237] sm:$0xff]
        %v244 = vld [vmem:[%s237 + $0x8] sm:$0xff]
        %v245 = vld [vmem:[%s237 + $0x10] sm:$0xff]
        %v246 = vld [vmem:[%s237 + $0x18] sm:$0xff]
        %v247 = vld [vmem:[%s237 + $0x20] sm:$0xff]
        %v248 = vld [vmem:[%s237 + $0x28] sm:$0xff]
        %v249 = vld [vmem:[%s237 + $0x30] sm:$0xff]
        %v250 = vld [vmem:[%s237 + $0x38] sm:$0xff]
        %v251 = vld [vmem:[%s237 + $0x40] sm:$0xff]
        %v252 = vld [vmem:[%s237 + $0x48] sm:$0xff]
        %v253 = vld [vmem:[%s237 + $0x50] sm:$0xff]
        %v254 = vld [vmem:[%s237 + $0x58] sm:$0xff]
        %v255 = vld [vmem:[%s237 + $0x60] sm:$0xff]
        %v256 = vld [vmem:[%s237 + $0x68] sm:$0xff]
        %v257 = vld [vmem:[%s237 + $0x70] sm:$0xff]
        %v258 = vld [vmem:[%s237 + $0x78] sm:$0xff]
        %260 = vset.pattern.permute.xlu0 0
        %261 = vperm.xlu0 %260, %v241
        %v262 = vpop.permute.xlu0 %261
        %vm264 = vcmask 261120
        %v266 = vsel %vm264, %v242, 0
        %v269 = vsel %vm264, %v243, 0
        %v272 = vsel %vm264, %v244, 0
        %v275 = vsel %vm264, %v245, 0
        %v278 = vsel %vm264, %v246, 0
        %v281 = vsel %vm264, %v247, 0
        %v284 = vsel %vm264, %v248, 0
        %v287 = vsel %vm264, %v249, 0
        %v290 = vsel %vm264, %v250, 0
        %v293 = vsel %vm264, %v251, 0
        %v296 = vsel %vm264, %v252, 0
        %v299 = vsel %vm264, %v253, 0
        %v302 = vsel %vm264, %v254, 0
        %v305 = vsel %vm264, %v255, 0
        %v308 = vsel %vm264, %v256, 0
        %v311 = vsel %vm264, %v257, 0
        %v314 = vsel %vm264, %v258, 0
        %316 = vmatprep.subr.mxu0 0.0
        %317 = vmatpush1.xpose.msra.mxu0 %v269
        %318 = vmatprep.subr.mxu0 0.0
        %319 = vmatpush1.xpose.msra.mxu0 %v272
        %320 = vmatprep.subr.mxu0 0.0
        %321 = vmatpush1.xpose.msra.mxu0 %v275
        %322 = vmatprep.subr.mxu0 0.0
        %323 = vmatpush1.xpose.msra.mxu0 %v278
        %324 = vmatprep.subr.mxu0 0.0
        %325 = vmatpush1.xpose.msra.mxu0 %v281
        %326 = vmatprep.subr.mxu0 0.0
        %327 = vmatpush1.xpose.msra.mxu0 %v284
        %328 = vmatprep.subr.mxu0 0.0
        %329 = vmatpush1.xpose.msra.mxu0 %v287
        %330 = vmatprep.subr.mxu0 0.0
        %331 = vmatpush1.xpose.msra.mxu0 %v290
        %332 = vmatprep.subr.mxu0 0.0
        %333 = vmatpush1.xpose.msra.mxu0 %v293
        %334 = vmatprep.subr.mxu0 0.0
        %335 = vmatpush1.xpose.msra.mxu0 %v296
        %336 = vmatprep.subr.mxu0 0.0
        %337 = vmatpush1.xpose.msra.mxu0 %v299
        %338 = vmatprep.subr.mxu0 0.0
        %339 = vmatpush1.xpose.msra.mxu0 %v302
        %340 = vmatprep.subr.mxu0 0.0
        %341 = vmatpush1.xpose.msra.mxu0 %v305
        %342 = vmatprep.subr.mxu0 0.0
        %343 = vmatpush1.xpose.msra.mxu0 %v308
        %344 = vmatprep.subr.mxu0 0.0
        %345 = vmatpush1.xpose.msra.mxu0 %v311
        %346 = vmatprep.subr.mxu0 0.0
        %347 = vmatpush1.xpose.msra.mxu0 %v314
        %348 = vmatprep.subr.mxu0 0.0
        %349 = vmatpush1.xpose.msra.mxu0 0.0
        %350 = vmatprep.subr.mxu0 0.0
        %351 = vmatpush1.xpose.msra.mxu0 0.0
        %352 = vmatprep.subr.mxu0 0.0
        %353 = vmatpush1.xpose.msra.mxu0 0.0
        %354 = vmatprep.subr.mxu0 0.0
        %355 = vmatpush1.xpose.msra.mxu0 0.0
        %356 = vmatprep.subr.mxu0 0.0
        %357 = vmatpush1.xpose.msra.mxu0 0.0
        %358 = vmatprep.subr.mxu0 0.0
        %359 = vmatpush1.xpose.msra.mxu0 0.0
        %360 = vmatprep.subr.mxu0 0.0
        %361 = vmatpush1.xpose.msra.mxu0 0.0
        %362 = vmatprep.subr.mxu0 0.0
        %363 = vmatpush1.xpose.msra.mxu0 0.0
        %364 = vmatprep.subr.mxu0 0.0
        %365 = vmatpush1.xpose.msra.mxu0 0.0
        %366 = vmatprep.subr.mxu0 0.0
        %367 = vmatpush1.xpose.msra.mxu0 0.0
        %368 = vmatprep.subr.mxu0 0.0
        %369 = vmatpush1.xpose.msra.mxu0 0.0
        %370 = vmatprep.subr.mxu0 0.0
        %371 = vmatpush1.xpose.msra.mxu0 0.0
        %372 = vmatprep.subr.mxu0 0.0
        %373 = vmatpush1.xpose.msra.mxu0 0.0
        %374 = vmatprep.subr.mxu0 0.0
        %375 = vmatpush1.xpose.msra.mxu0 0.0
        %376 = vmatprep.subr.mxu0 0.0
        %377 = vmatpush1.xpose.msra.mxu0 0.0
        %378 = vmatprep.subr.mxu0 0.0
        %379 = vmatpush1.xpose.msra.mxu0 0.0
        %380 = vmatprep.mubr.f32.mxu0 0.0
        %381 = vmatmul.mubr.f32.gmra.mrb[0].mxu0 %v266
        %v382 = vpop.f32.mrb[0].mxu0
        %v383 = vadd.f32 %v262, %v382
        %v384 = vpop.f32.mrb[0].mxu0
        %385 = vdwg.mxu0
        %v386 = vrot.slane %v383, 4
        %v387 = vmax.f32 %v383, %v386
        %v388 = vrot.slane %v387, 2
        %v389 = vmax.f32 %v387, %v388
        %v390 = vrot.slane %v389, 1
        %v391 = vmax.f32 %v389, %v390
        %v392 = vsub.f32 %v383, %v391
        %v393 = vmul.f32 %v392, 1.442695
        %v394 = vpow.pop %v393
        %v395 = vrot.slane %v394, 4
        %v396 = vadd.f32 %v394, %v395
        %v397 = vrot.slane %v396, 2
        %v398 = vadd.f32 %v396, %v397
        %v399 = vrot.slane %v398, 1
        %v400 = vadd.f32 %v398, %v399
        %v401 = vrcp.pop %v400
        %v402 = vmul.f32 %v394, %v401
        %403 = vst [vmem:[%s221] sm:$0xff] %v402
        %v404 = vlaneseq
        %v405 = vshrl.u32 %v404, 7
        %v406 = vrot.slane %v402, 4
        %v407 = vmax.f32 %v402, %v406
        %v408 = vrot.slane %v407, 2
        %v409 = vmax.f32 %v407, %v408
        %v410 = vrot.slane %v409, 1
        %v411 = vmax.f32 %v409, %v410
        %vm412 = vcmp.eq.f32.partialorder %v402, %v411
        %v413 = vsel %vm412, %v405, 8
        %v414 = vrot.slane %v413, 4
        %vm415 = vcmp.lt.s32.totalorder %v413, %v414
        %v416 = vsel %vm415, %v413, %v414
        %v417 = vrot.slane %v416, 2
        %vm418 = vcmp.lt.s32.totalorder %v416, %v417
        %v419 = vsel %vm418, %v416, %v417
        %v420 = vrot.slane %v419, 1
        %vm421 = vcmp.lt.s32.totalorder %v419, %v420
        %v422 = vsel %vm421, %v419, %v420
        %v423 = vcvt.s32.f32 %v422
        %vm424 = vcmp.eq.s32.totalorder %v405, %v422
        %v425 = vsel %vm424, -inf, %v402
        %v426 = vrot.slane %v425, 4
        %v427 = vmax.f32 %v425, %v426
        %v428 = vrot.slane %v427, 2
        %v429 = vmax.f32 %v427, %v428
        %v430 = vrot.slane %v429, 1
        %v431 = vmax.f32 %v429, %v430
        %vm432 = vcmp.eq.f32.partialorder %v425, %v431
        %v433 = vsel %vm432, %v405, 8
        %v434 = vrot.slane %v433, 4
        %vm435 = vcmp.lt.s32.totalorder %v433, %v434
        %v436 = vsel %vm435, %v433, %v434
        %v437 = vrot.slane %v436, 2
        %vm438 = vcmp.lt.s32.totalorder %v436, %v437
        %v439 = vsel %vm438, %v436, %v437
        %v440 = vrot.slane %v439, 1
        %vm441 = vcmp.lt.s32.totalorder %v439, %v440
        %v442 = vsel %vm441, %v439, %v440
        %v443 = vcvt.s32.f32 %v442
        %v444 = vadd.f32 %v411, %v431
        %v445 = vadd.f32 %v444, 1e-20
        %v446 = vrcp.pop %v445
        %v447 = vmul.f32 1.0, %v446
        %v448 = vmul.f32 %v411, %v447
        %v449 = vmul.f32 %v431, %v447
        %vm450 = vcmask 1040384
        %v451 = vsel %vm450, %v423, %v443
        %vm452 = vcmask 1041408
        %v453 = vsel %vm452, %v451, %v448
        %vm454 = vcmask 1042432
        %v455 = vsel %vm454, %v453, %v449
        %456 = vst [vmem:[%s228] sm:$0xf] %v455
        %s457 = sand.u32 %s114, 1
        %s458 = scalar_lea.sflag [#allocation3], %s457
        %s459 = sand.u32 %s114, 1
        %s460 = smul.addr %s459, 8
        %s461 = scalar_lea.vmem [#allocation2], %s460
        %s462 = sand.u32 %s142, 1
        %s463 = scalar_lea.sflag [#allocation5], %s462
        %s464 = sand.u32 %s142, 1
        %s465 = smul.addr %s464, 4
        %s466 = scalar_lea.vmem [#allocation4], %s465
        // Predicated region
        $region33: #{tpu_custom_call.1} parent=31 // pred_check
          %p467 = pneg %p124
        $region34: #{tpu_custom_call.1} parent=31 // pred_check_branch
          %469 = sbr.rel (%p467) target = $region36
        $region35: #{tpu_custom_call.1} parent=31 // pred_region
          %s471 = ssub.s32 128, 128
          %472 = vsyncadd %s458, %s471
          %s473 = sadd.s32 %s27, %s26
          %s474 = smul.addr %s473, 128
          %s475 = scalar_lea.hbm %s3, %s474
          %s477 = sshll.u32 %s461, 4
          %s478 = int_to_ptr.vmem [resolvable:$true] %s477
          %480 = dma.vmem_to_hbm [thread:$0]  %s478, 128, %s475, %s458
        $region36: #{tpu_custom_call.1} parent=31 // pred_fallthru
          _
        // Predicated region
        $region37: #{tpu_custom_call.1} parent=31 // pred_check
          %p481 = pneg %p152
        $region38: #{tpu_custom_call.1} parent=31 // pred_check_branch
          %483 = sbr.rel (%p481) target = $region40
        $region39: #{tpu_custom_call.1} parent=31 // pred_region
          %s485 = ssub.s32 64, 64
          %486 = vsyncadd %s463, %s485
          %s487 = sadd.s32 %s27, %s26
          %s488 = smul.addr %s487, 64
          %s489 = scalar_lea.hbm %s4, %s488
          %s491 = sshll.u32 %s466, 4
          %s492 = int_to_ptr.vmem [resolvable:$true] %s491
          %494 = dma.vmem_to_hbm [thread:$0]  %s492, 64, %s489, %s463
        $region40: #{tpu_custom_call.1} parent=31 // pred_fallthru
          _
      $region32: #{tpu_custom_call.1} parent=5 // pred_fallthru
        _
      %p495 = scmp.le.s32.totalorder 2, %s17
      // Predicated region
      $region41: #{tpu_custom_call.1} parent=5 // pred_check
        %p496 = pneg %p495
      $region42: #{tpu_custom_call.1} parent=5 // pred_check_branch
        %498 = sbr.rel (%p496) target = $region44
      $region43: #{tpu_custom_call.1} parent=5 // pred_region
        %s499 = ssub.s32 %s17, 2
        // Predicated region
        $region45: #{tpu_custom_call.1} parent=43 // pred_check
          %p500 = pneg %p130
        $region46: #{tpu_custom_call.1} parent=43 // pred_check_branch
          %502 = sbr.rel (%p500) target = $region48
        $region47: #{tpu_custom_call.1} parent=43 // pred_region
          %s503 = sand.u32 %s115, 1
          %s504 = scalar_lea.sflag [#allocation3], %s503
          %s505 = sand.u32 %s115, 1
          %s506 = smul.addr %s505, 8
          %s507 = scalar_lea.vmem [#allocation2], %s506
          %508 = dma.done %s504, 128
        $region48: #{tpu_custom_call.1} parent=43 // pred_fallthru
          _
        // Predicated region
        $region49: #{tpu_custom_call.1} parent=43 // pred_check
          %p509 = pneg %p158
        $region50: #{tpu_custom_call.1} parent=43 // pred_check_branch
          %511 = sbr.rel (%p509) target = $region52
        $region51: #{tpu_custom_call.1} parent=43 // pred_region
          %s512 = sand.u32 %s143, 1
          %s513 = scalar_lea.sflag [#allocation5], %s512
          %s514 = sand.u32 %s143, 1
          %s515 = smul.addr %s514, 4
          %s516 = scalar_lea.vmem [#allocation4], %s515
          %517 = dma.done %s513, 64
        $region52: #{tpu_custom_call.1} parent=43 // pred_fallthru
          _
      $region44: #{tpu_custom_call.1} parent=5 // pred_fallthru
        _
    $region6: #{tpu_custom_call.1} parent=1 // loop_footer
      %s21 = sadd.s32 1, %s17
    $region7: #{tpu_custom_call.1} parent=1 // loop_footer_branch
      %16 = sbr.rel target = $region3
    $region8: #{tpu_custom_call.1} parent=1 // loop_exit
      _
    %518 = vsyncpa [#allocation3], 1
    %s519 = scalar_lea.sflag [#allocation3], 1
    %520 = vsyncpa %s519, 1
    %521 = vsyncpa [#allocation5], 1
    %s522 = scalar_lea.sflag [#allocation5], 1
    %523 = vsyncpa %s522, 1

</llo_original>
